<compile_context>
chip_gen: v7x
topology: tpu7x:2x2x1
jax: 0.10.0
libtpu: 0.0.40
codegen_flags: <defaults>
</compile_context>

<pallas_src>
import functools
import math

import jax
import jax.numpy as jnp
from jax.experimental import pallas as pl
from jax.experimental.pallas import tpu as pltpu


LANES = 128
SUBLANES = 8
ACC_ROWS = 64                      # small accumulator (8 vregs) -> good ILP
MIN_KERNEL_ELEMS = 64 * 1024       # below this, plain jnp beats the kernel
VMEM_LIMIT_BYTES = 40 * 1024 * 1024


def _device_config():
    """Returns (num_cores, max_block_rows) tuned per TPU generation."""
    try:
        kind = jax.devices()[0].device_kind.lower()
    except Exception:  # pragma: no cover - defensive
        kind = ""
    if "v7" in kind:
        # 2 TensorCores/chip; fast HBM -> 4 MiB/input/buffer blocks.
        return 2, 8192
    if "v6" in kind:
        return 1, 4096
    if "v5" in kind:
        # 16 MiB scoped-VMEM default on v5e: keep 2 MiB/input/buffer.
        return 1, 4096
    return 1, 2048


def _sse_kernel(xr_ref, x_ref, out_ref, acc_ref, *, rows, block_rows, acc_rows,
                steps_per_core, full_blocks, any_masked):
    """Accumulates sum((x_recon - x)^2) into a per-core (8, 128) partial."""
    c = pl.program_id(0)            # core split (parallel)
    i = pl.program_id(1)            # row-block loop (arbitrary / reduction)

    @pl.when(i == 0)
    def _():
        acc_ref[...] = jnp.zeros_like(acc_ref)

    def diff():
        return xr_ref[...].astype(jnp.float32) - x_ref[...].astype(jnp.float32)

    def accumulate(d):
        sq = d * d
        acc_ref[...] += sq.reshape(block_rows // acc_rows, acc_rows,
                                   LANES).sum(axis=0)

    if any_masked:
        # Unclamped logical block index (the in_spec index_map clamps the DMA
        # so a surplus step never reads out of bounds; here the unclamped
        # value is used so duplicated / partial blocks are masked to zero).
        blk = c * steps_per_core + i

        @pl.when(blk < full_blocks)
        def _():                                  # hot path: no mask work
            accumulate(diff())

        @pl.when(blk >= full_blocks)
        def _():                                  # cold path: ragged/surplus
            row0 = blk * block_rows
            rid = jax.lax.broadcasted_iota(jnp.int32, (block_rows, LANES), 0)
            valid = (rid + row0) < rows
            accumulate(jnp.where(valid, diff(), 0.0))
    else:
        accumulate(diff())

    @pl.when(i == pl.num_programs(1) - 1)
    def _():
        # One small cross-sublane-group reduce per core; wrapper sums the rest.
        out_ref[...] = acc_ref[...].reshape(acc_rows // SUBLANES, SUBLANES,
                                            LANES).sum(axis=0)[None]


def custom_loss(x_recon, x, mu, logvar, epoch=0, *,
                min_kernel_elems=MIN_KERNEL_ELEMS):
    """Scalar loss_MSE + loss_KLD (float32), matching customLoss.forward."""
    del epoch  # unused by the reference forward
    # TODO(synk): confirm the real module never anneals KLD by epoch.
    assert x_recon.shape == x.shape

    # KLD on the tiny (B, Z) latents: plain jnp in the wrapper.
    mu32 = mu.astype(jnp.float32)
    lv32 = logvar.astype(jnp.float32)
    loss_kld = -1.0 * jnp.sum(1.0 + lv32 - mu32 * mu32 - jnp.exp(lv32))

    xr_flat = x_recon.reshape(-1)
    x_flat = x.reshape(-1)
    n = xr_flat.shape[0]

    chunk = SUBLANES * LANES
    n_main = (n // chunk) * chunk

    # Small-input fallback: the pallas_call would be pure fixed cost here.
    if n < min_kernel_elems or n_main == 0:
        d = xr_flat.astype(jnp.float32) - x_flat.astype(jnp.float32)
        return jnp.sum(d * d) + loss_kld

    # Non-1024-aligned tail: tiny jnp sum instead of padding (no full-array
    # copy / doubled HBM traffic).
    if n_main < n:
        td = (xr_flat[n_main:].astype(jnp.float32)
              - x_flat[n_main:].astype(jnp.float32))
        tail_sse = jnp.sum(td * td)
    else:
        tail_sse = jnp.float32(0.0)

    xr2d = xr_flat[:n_main].reshape(-1, LANES)
    x2d = x_flat[:n_main].reshape(-1, LANES)
    rows = xr2d.shape[0]                       # multiple of 8

    num_cores, max_block_rows = _device_config()

    block_rows = min(max_block_rows, rows)     # multiple of 8, <= rows
    acc_rows = math.gcd(ACC_ROWS, block_rows)  # multiple of 8, divides block
    steps = pl.cdiv(rows, block_rows)
    steps_per_core = pl.cdiv(steps, num_cores)
    full_blocks = rows // block_rows           # blocks with no invalid rows
    any_masked = full_blocks < num_cores * steps_per_core
    last_block = steps - 1

    def in_map(c, i):
        # Clamp so the DMA never starts past the end of the array; the kernel
        # masks the (rare) duplicated / ragged block to zero.
        return (jnp.minimum(c * steps_per_core + i, last_block), 0)

    itemsize_xr = jnp.dtype(x_recon.dtype).itemsize
    itemsize_x = jnp.dtype(x.dtype).itemsize
    cost = pl.CostEstimate(
        flops=3 * n_main,
        transcendentals=0,
        bytes_accessed=n_main * (itemsize_xr + itemsize_x)
        + num_cores * SUBLANES * LANES * 4,
    )

    kernel = functools.partial(
        _sse_kernel,
        rows=rows,
        block_rows=block_rows,
        acc_rows=acc_rows,
        steps_per_core=steps_per_core,
        full_blocks=full_blocks,
        any_masked=any_masked,
    )

    partials = pl.pallas_call(
        kernel,
        out_shape=jax.ShapeDtypeStruct((num_cores, SUBLANES, LANES),
                                       jnp.float32),
        grid_spec=pltpu.PrefetchScalarGridSpec(
            num_scalar_prefetch=0,
            grid=(num_cores, steps_per_core),
            in_specs=[
                pl.BlockSpec((block_rows, LANES), in_map),
                pl.BlockSpec((block_rows, LANES), in_map),
            ],
            out_specs=pl.BlockSpec((1, SUBLANES, LANES),
                                   lambda c, i: (c, 0, 0)),
            scratch_shapes=[pltpu.VMEM((acc_rows, LANES), jnp.float32)],
        ),
        compiler_params=pltpu.CompilerParams(
            dimension_semantics=("parallel", "arbitrary"),
            vmem_limit_bytes=VMEM_LIMIT_BYTES,
        ),
        cost_estimate=cost,
    )(xr2d, x2d)

    return jnp.sum(partials) + tail_sse + loss_kld


def _reference(x_recon, x, mu, logvar):
    mse = jnp.sum((x_recon.astype(jnp.float32) - x.astype(jnp.float32)) ** 2)
    kld = -1.0 * jnp.sum(1.0 + logvar - mu**2 - jnp.exp(logvar))
    return mse + kld


if __name__ == "__main__":
    key = jax.random.PRNGKey(0)
    ks = jax.random.split(key, 8)

    # Module-implied small shapes: NCHW image batch + latents.
    B, C, H, W = 2, 4, 16, 16
    Z = 32
    x_recon = jax.random.normal(ks[0], (B, C, H, W), dtype=jnp.float32)
    x = jax.random.normal(ks[1], (B, C, H, W), dtype=jnp.float32)
    mu = jax.random.normal(ks[2], (B, Z), dtype=jnp.float32)
    logvar = 0.1 * jax.random.normal(ks[3], (B, Z), dtype=jnp.float32)
    ref_small = _reference(x_recon, x, mu, logvar)

    # (a) Default path: small-input jnp fallback.
    loss_a = jax.block_until_ready(custom_loss(x_recon, x, mu, logvar, epoch=0))
    assert jnp.allclose(loss_a, ref_small, rtol=1e-5, atol=1e-4), (loss_a,
                                                                   ref_small)

    # (b) Force the Pallas kernel at the module shapes.
    loss_b = jax.block_until_ready(
        custom_loss(x_recon, x, mu, logvar, epoch=0, min_kernel_elems=0))
    assert jnp.allclose(loss_b, ref_small, rtol=1e-5, atol=1e-4), (loss_b,
                                                                   ref_small)

    # (c) Larger case exercising multi-block streaming, the masked partial
    #     block, the surplus-block clamp, and the non-1024-aligned tail.
    B2, C2, H2, W2 = 4, 4, 300, 301     # 1,444,800 elems (not 1024-aligned)
    xr2 = jax.random.normal(ks[4], (B2, C2, H2, W2), dtype=jnp.float32)
    x2 = jax.random.normal(ks[5], (B2, C2, H2, W2), dtype=jnp.float32)
    mu2 = jax.random.normal(ks[6], (B2, Z), dtype=jnp.float32)
    lv2 = 0.1 * jax.random.normal(ks[7], (B2, Z), dtype=jnp.float32)
    loss_c = jax.block_until_ready(custom_loss(xr2, x2, mu2, lv2, epoch=0))
    ref_c = _reference(xr2, x2, mu2, lv2)
    assert jnp.allclose(loss_c, ref_c, rtol=1e-4), (loss_c, ref_c)

    print("KERNEL_OK")
</pallas_src>

<mosaic_0001>
module attributes {stable_mosaic.version = 11 : i64} {
  func.func @_sse_kernel(%arg0: i32, %arg1: i32, %arg2: memref<16x128xf32, #tpu.memory_space<vmem>>, %arg3: memref<16x128xf32, #tpu.memory_space<vmem>>, %arg4: memref<1x8x128xf32, #tpu.memory_space<vmem>>, %arg5: memref<16x128xf32, #tpu.memory_space<vmem>>) attributes {dimension_semantics = [#tpu.dimension_semantics<parallel>, #tpu.dimension_semantics<arbitrary>], iteration_bounds = array<i64: 1, 1>, scalar_prefetch = 0 : i64, scratch_operands = 1 : i64, tpu.core_type = #tpu.core_type<tc>, window_params = [{transform_indices = @transform_0, window_bounds = array<i64: 16, 128>}, {transform_indices = @transform_1, window_bounds = array<i64: 16, 128>}, {transform_indices = @transform_2, window_bounds = array<i64: 1, 8, 128>}]} {
    %c0_i32 = arith.constant 0 : i32
    %0 = arith.cmpi eq, %arg1, %c0_i32 : i32
    %1 = arith.extui %0 : i1 to i32
    %c0_i32_0 = arith.constant 0 : i32
    %2 = arith.cmpi ne, %1, %c0_i32_0 : i32
    scf.if %2 {
      %cst_10 = arith.constant 0.000000e+00 : f32
      %15 = vector.broadcast %cst_10 : f32 to vector<16x128xf32>
      %c0_11 = arith.constant 0 : index
      %c0_12 = arith.constant 0 : index
      %16 = vector.load %arg5[%c0_11, %c0_12] : memref<16x128xf32, #tpu.memory_space<vmem>>, vector<16x128xf32>
      tpu.vector_store %arg5[%c0_11, %c0_12], %15 {strides = array<i32>} : memref<16x128xf32, #tpu.memory_space<vmem>>, vector<16x128xf32>,
    } else {
    }
    %c0 = arith.constant 0 : index
    %c0_1 = arith.constant 0 : index
    %3 = vector.load %arg2[%c0, %c0_1] : memref<16x128xf32, #tpu.memory_space<vmem>>, vector<16x128xf32>
    %c0_2 = arith.constant 0 : index
    %c0_3 = arith.constant 0 : index
    %4 = vector.load %arg3[%c0_2, %c0_3] : memref<16x128xf32, #tpu.memory_space<vmem>>, vector<16x128xf32>
    %5 = arith.subf %3, %4 : vector<16x128xf32>
    %6 = arith.mulf %5, %5 : vector<16x128xf32>
    %c0_4 = arith.constant 0 : index
    %c0_5 = arith.constant 0 : index
    %7 = vector.load %arg5[%c0_4, %c0_5] : memref<16x128xf32, #tpu.memory_space<vmem>>, vector<16x128xf32>
    %8 = vector.shape_cast %6 : vector<16x128xf32> to vector<1x16x128xf32>
    %cst = arith.constant dense<0.000000e+00> : vector<16x128xf32>
    %9 = vector.multi_reduction <add>, %8, %cst [0] : vector<1x16x128xf32> to vector<16x128xf32>
    %10 = arith.addf %7, %9 : vector<16x128xf32>
    %c0_6 = arith.constant 0 : index
    %c0_7 = arith.constant 0 : index
    %11 = vector.load %arg5[%c0_6, %c0_7] : memref<16x128xf32, #tpu.memory_space<vmem>>, vector<16x128xf32>
    tpu.vector_store %arg5[%c0_6, %c0_7], %10 {strides = array<i32>} : memref<16x128xf32, #tpu.memory_space<vmem>>, vector<16x128xf32>,
    %c0_i32_8 = arith.constant 0 : i32
    %12 = arith.cmpi eq, %arg1, %c0_i32_8 : i32
    %13 = arith.extui %12 : i1 to i32
    %c0_i32_9 = arith.constant 0 : i32
    %14 = arith.cmpi ne, %13, %c0_i32_9 : i32
    scf.if %14 {
      %c0_10 = arith.constant 0 : index
      %c0_11 = arith.constant 0 : index
      %15 = vector.load %arg5[%c0_10, %c0_11] : memref<16x128xf32, #tpu.memory_space<vmem>>, vector<16x128xf32>
      %16 = vector.shape_cast %15 : vector<16x128xf32> to vector<2x8x128xf32>
      %cst_12 = arith.constant dense<0.000000e+00> : vector<8x128xf32>
      %17 = vector.multi_reduction <add>, %16, %cst_12 [0] : vector<2x8x128xf32> to vector<8x128xf32>
      %18 = vector.shape_cast %17 : vector<8x128xf32> to vector<1x8x128xf32>
      %c0_13 = arith.constant 0 : index
      %c0_14 = arith.constant 0 : index
      %c0_15 = arith.constant 0 : index
      %19 = vector.load %arg4[%c0_13, %c0_14, %c0_15] : memref<1x8x128xf32, #tpu.memory_space<vmem>>, vector<1x8x128xf32>
      tpu.vector_store %arg4[%c0_13, %c0_14, %c0_15], %18 {strides = array<i32>} : memref<1x8x128xf32, #tpu.memory_space<vmem>>, vector<1x8x128xf32>,
    } else {
    }
    return
  }
  func.func @transform_0(%arg0: i32, %arg1: i32) -> (i32, i32) {
    %c1_i32 = arith.constant 1 : i32
    %0 = arith.muli %arg0, %c1_i32 : i32
    %1 = arith.addi %0, %arg1 : i32
    %c0_i32 = arith.constant 0 : i32
    %2 = arith.minsi %1, %c0_i32 : i32
    %c0_i32_0 = arith.constant 0 : i32
    %c0_i32_1 = arith.constant 0 : i32
    return %2, %c0_i32_0 : i32, i32
  }
  func.func @transform_1(%arg0: i32, %arg1: i32) -> (i32, i32) {
    %c1_i32 = arith.constant 1 : i32
    %0 = arith.muli %arg0, %c1_i32 : i32
    %1 = arith.addi %0, %arg1 : i32
    %c0_i32 = arith.constant 0 : i32
    %2 = arith.minsi %1, %c0_i32 : i32
    %c0_i32_0 = arith.constant 0 : i32
    %c0_i32_1 = arith.constant 0 : i32
    return %2, %c0_i32_0 : i32, i32
  }
  func.func @transform_2(%arg0: i32, %arg1: i32) -> (i32, i32, i32) {
    %c0_i32 = arith.constant 0 : i32
    %c0_i32_0 = arith.constant 0 : i32
    %c0_i32_1 = arith.constant 0 : i32
    return %arg0, %c0_i32, %c0_i32_0 : i32, i32, i32
  }
}

</mosaic_0001>

<llo_original>
// kernel: tpu_custom_call.1
$region0: #{tpu_custom_call.1}
  #allocation0 [shape = 'u32[]', space=smem, size = 0x4, offset = 0x4, fixed_abs, tag = 'smem constant byte address 0x4 - core index']
  #allocation1 [shape = 'u32[144,128]{1,0:T(1,128)}', space=vmem, size = 0x12000, scoped, tag = 'internal scratch']
  #allocation2 [shape = 'f32[16,128]{1,0:T(8,128)}', space=vmem, size = 0x2000, scoped, tag = 'scratch operand']
  %s0 = inlined_call_operand.hbm [shape: f32[16,128], index: 0, kind: input, shape index: {}]
  %s1 = inlined_call_operand.hbm [shape: f32[16,128], index: 1, kind: input, shape index: {}]
  %s2 = inlined_call_operand.hbm [shape: f32[1,8,128], index: 2, kind: output, shape index: {}]
  %s3 = sld [smem:[#allocation0]]
  $region34: #{tpu_custom_call.1} parent=0
    _
  %s5 = ssub.s32 1, %s3
  %s6 = scalar_select 0, %s5, %s3
  $region1: #{tpu_custom_call.1} parent=0
    #allocation3 [shape = 'u8[8192]{0}', space=vmem, size = 0x2000, scoped, tag = 'input window, operand 0, single buffered']
    #allocation4 [shape = 's32[1]{0}', space=sflag, size = 0x4, scoped, tag = 'scoped memory for tpu_custom_call.1']
    #allocation5 [shape = 's32[1]{0}', space=sflag, size = 0x4, scoped, tag = 'scoped memory for tpu_custom_call.1']
    #allocation6 [shape = 'u8[8192]{0}', space=vmem, size = 0x2000, scoped, tag = 'input window, operand 1, single buffered']
    #allocation7 [shape = 's32[1]{0}', space=sflag, size = 0x4, scoped, tag = 'scoped memory for tpu_custom_call.1']
    #allocation8 [shape = 'u8[4096]{0}', space=vmem, size = 0x1000, scoped, tag = 'output window, operand 0, single buffered']
    %7 = vsyncpa [#allocation4], 0
    %8 = vsyncpa [#allocation7], 0
    %9 = vsyncpa [#allocation5], 0
    // Predicated region
    $region2: #{tpu_custom_call.1} parent=1 // pred_check
      _
    $region3: #{tpu_custom_call.1} parent=1 // pred_check_branch
      %11 = sbr.rel (0) target = $region5
    $region4: #{tpu_custom_call.1} parent=1 // pred_region
      %s12 = sadd.s32 0, 0
      %p13 = scmp.lt.s32.totalorder %s12, 0
      %s14 = scalar_select %p13, %s12, 0
      %s15 = smul.u32 2, %s14
      %s17 = ssub.s32 256, 256
      %18 = vsyncadd [#allocation4], %s17
      %s19 = smul.addr %s15, 128
      %s20 = scalar_lea.hbm %s0, %s19
      %s21 = sshll.u32 [#allocation3], 4
      %s22 = int_to_ptr.vmem [resolvable:$true] %s21
      %27 = dma.hbm_to_vmem [thread:$0]  %s20, 256, %s22, [#allocation4], 128, 128, 8
    $region5: #{tpu_custom_call.1} parent=1 // pred_fallthru
      _
    // Predicated region
    $region6: #{tpu_custom_call.1} parent=1 // pred_check
      _
    $region7: #{tpu_custom_call.1} parent=1 // pred_check_branch
      %29 = sbr.rel (0) target = $region9
    $region8: #{tpu_custom_call.1} parent=1 // pred_region
      %s30 = sadd.s32 0, 0
      %p31 = scmp.lt.s32.totalorder %s30, 0
      %s32 = scalar_select %p31, %s30, 0
      %s33 = smul.u32 2, %s32
      %s35 = ssub.s32 256, 256
      %36 = vsyncadd [#allocation7], %s35
      %s37 = smul.addr %s33, 128
      %s38 = scalar_lea.hbm %s1, %s37
      %s39 = sshll.u32 [#allocation6], 4
      %s40 = int_to_ptr.vmem [resolvable:$true] %s39
      %45 = dma.hbm_to_vmem [thread:$0]  %s38, 256, %s40, [#allocation7], 128, 128, 8
    $region9: #{tpu_custom_call.1} parent=1 // pred_fallthru
      _
    // Predicated region
    $region10: #{tpu_custom_call.1} parent=1 // pred_check
      _
    $region11: #{tpu_custom_call.1} parent=1 // pred_check_branch
      %47 = sbr.rel (0) target = $region13
    $region12: #{tpu_custom_call.1} parent=1 // pred_region
      %48 = dma.done [#allocation4], 256
    $region13: #{tpu_custom_call.1} parent=1 // pred_fallthru
      _
    // Predicated region
    $region14: #{tpu_custom_call.1} parent=1 // pred_check
      _
    $region15: #{tpu_custom_call.1} parent=1 // pred_check_branch
      %50 = sbr.rel (0) target = $region17
    $region16: #{tpu_custom_call.1} parent=1 // pred_region
      %51 = dma.done [#allocation7], 256
    $region17: #{tpu_custom_call.1} parent=1 // pred_fallthru
      _
    %s52 = sadd.s32 0, 0
    %p53 = scmp.lt.s32.totalorder %s52, 0
    %s54 = scalar_select %p53, %s52, 0
    %s55 = smul.u32 2, %s54
    %s56 = sadd.s32 0, 0
    %p57 = scmp.lt.s32.totalorder %s56, 0
    %s58 = scalar_select %p57, %s56, 0
    %s59 = smul.u32 2, %s58
    %p60 = scmp.eq.s32.totalorder 0, 0
    // Predicated region
    $region18: #{tpu_custom_call.1} parent=1 // pred_check
      %p61 = pneg %p60
    $region19: #{tpu_custom_call.1} parent=1 // pred_check_branch
      %63 = sbr.rel (%p61) target = $region21
    $region20: #{tpu_custom_call.1} parent=1 // pred_region
      %64 = vst [vmem:[#allocation2] sm:$0xff] 0.0
      %65 = vst [vmem:[#allocation2 + $0x8] sm:$0xff] 0.0
    $region21: #{tpu_custom_call.1} parent=1 // pred_fallthru
      _
    %v66 = vld [vmem:[#allocation3] sm:$0xff]
    %v67 = vld [vmem:[#allocation3 + $0x8] sm:$0xff]
    %v68 = vld [vmem:[#allocation6] sm:$0xff]
    %v69 = vld [vmem:[#allocation6 + $0x8] sm:$0xff]
    %v70 = vsub.f32 %v66, %v68
    %v71 = vsub.f32 %v67, %v69
    %v72 = vmul.f32 %v70, %v70
    %v73 = vmul.f32 %v71, %v71
    %v74 = vld [vmem:[#allocation2] sm:$0xff]
    %v75 = vld [vmem:[#allocation2 + $0x8] sm:$0xff]
    %v76 = vadd.f32 %v72, 0.0
    %v77 = vadd.f32 %v73, 0.0
    %v78 = vadd.f32 %v74, %v76
    %v79 = vadd.f32 %v75, %v77
    %80 = vst [vmem:[#allocation2] sm:$0xff] %v78
    %81 = vst [vmem:[#allocation2 + $0x8] sm:$0xff] %v79
    // Predicated region
    $region22: #{tpu_custom_call.1} parent=1 // pred_check
      %p82 = pneg %p60
    $region23: #{tpu_custom_call.1} parent=1 // pred_check_branch
      %84 = sbr.rel (%p82) target = $region25
    $region24: #{tpu_custom_call.1} parent=1 // pred_region
      %v85 = vld [vmem:[#allocation2] sm:$0xff]
      %v86 = vld [vmem:[#allocation2 + $0x8] sm:$0xff]
      %v87 = vadd.f32 %v85, %v86
      %88 = vst [vmem:[#allocation8] sm:$0xff] %v87
    $region25: #{tpu_custom_call.1} parent=1 // pred_fallthru
      _
    // Predicated region
    $region26: #{tpu_custom_call.1} parent=1 // pred_check
      _
    $region27: #{tpu_custom_call.1} parent=1 // pred_check_branch
      %90 = sbr.rel (0) target = $region29
    $region28: #{tpu_custom_call.1} parent=1 // pred_region
      %s92 = ssub.s32 128, 128
      %93 = vsyncadd [#allocation5], %s92
      %s95 = sshll.u32 [#allocation8], 4
      %s96 = int_to_ptr.vmem [resolvable:$true] %s95
      %98 = dma.vmem_to_hbm [thread:$0]  %s96, 128, %s2, [#allocation5]
    $region29: #{tpu_custom_call.1} parent=1 // pred_fallthru
      _
    // Predicated region
    $region30: #{tpu_custom_call.1} parent=1 // pred_check
      _
    $region31: #{tpu_custom_call.1} parent=1 // pred_check_branch
      %100 = sbr.rel (0) target = $region33
    $region32: #{tpu_custom_call.1} parent=1 // pred_region
      %101 = dma.done [#allocation5], 128
    $region33: #{tpu_custom_call.1} parent=1 // pred_fallthru
      _
    %102 = vsyncpa [#allocation4], 1
    %103 = vsyncpa [#allocation7], 1
    %104 = vsyncpa [#allocation5], 1

</llo_original>
